<compile_context>
chip_gen: v5e
topology: v5e:2x2
jax: 0.10.0
libtpu: 0.0.40
codegen_flags: <defaults>
</compile_context>

<pallas_src>
import functools
from typing import NamedTuple, Optional

import jax
import jax.numpy as jnp
from jax.experimental import pallas as pl
from jax.experimental.pallas import tpu as pltpu


def _round_up(x: int, m: int) -> int:
    return ((x + m - 1) // m) * m


# ---------------------------------------------------------------------------
# Kernel bodies (NN matmul: A (tm, tk) @ W_T (tk, tn) -> (tm, tn))
# ---------------------------------------------------------------------------

def _make_single_k_kernel(has_bias: bool):
    """K fits in one tile: no accumulator scratch, store the result directly."""
    if has_bias:
        def kernel(a_ref, w_ref, b_ref, o_ref):
            acc = jnp.dot(a_ref[...], w_ref[...],
                          preferred_element_type=jnp.float32)
            o_ref[...] = (acc + b_ref[...].astype(jnp.float32)).astype(o_ref.dtype)
    else:
        def kernel(a_ref, w_ref, o_ref):
            acc = jnp.dot(a_ref[...], w_ref[...],
                          preferred_element_type=jnp.float32)
            o_ref[...] = acc.astype(o_ref.dtype)
    return kernel


def _make_multi_k_kernel(has_bias: bool):
    """K tiled: f32 accumulator scratch; bias fused into the final K step."""
    def body(a_ref, w_ref, b_ref, o_ref, acc_ref):
        k = pl.program_id(2)

        @pl.when(k == 0)
        def _():
            acc_ref[...] = jnp.zeros_like(acc_ref)

        acc_ref[...] += jnp.dot(a_ref[...], w_ref[...],
                                preferred_element_type=jnp.float32)

        @pl.when(k == pl.num_programs(2) - 1)
        def _():
            out = acc_ref[...]
            if b_ref is not None:
                out = out + b_ref[...].astype(jnp.float32)
            o_ref[...] = out.astype(o_ref.dtype)

    if has_bias:
        def kernel(a_ref, w_ref, b_ref, o_ref, acc_ref):
            body(a_ref, w_ref, b_ref, o_ref, acc_ref)
    else:
        def kernel(a_ref, w_ref, o_ref, acc_ref):
            body(a_ref, w_ref, None, o_ref, acc_ref)
    return kernel


# ---------------------------------------------------------------------------
# Hardware-aware configuration
# ---------------------------------------------------------------------------

def _vmem_capacity_bytes() -> int:
    try:
        info = pltpu.get_tpu_info()
        cap = getattr(info, "vmem_capacity_bytes", None)
        if cap:
            return int(cap)
    except Exception:
        pass
    return 64 * 2**20  # conservative (v7x-sized) fallback


_TK_SINGLE_MAX = 4096  # d_model up to this stays a single K tile (bf16)


def _divisor_tile(total: int, cap: int) -> int:
    """Largest multiple of 128 <= cap that divides `total` (a multiple of 128)."""
    blocks = total // 128
    best = 128
    d = 1
    while d * 128 <= cap and d <= blocks:
        if blocks % d == 0:
            best = d * 128
        d += 1
    return best


class PreparedLMHead(NamedTuple):
    weight_t: jax.Array               # (K_pad, N_pad), compute dtype (bf16)
    bias2d: Optional[jax.Array]       # (1, N_pad) float32, or None
    vocab_size: int
    d_model: int
    tn: int
    tk: int
    tm_max: int
    vmem_limit: int


def prepare_lm_head(weight, bias=None, *, compute_dtype=jnp.bfloat16,
                    tn=None, tk=None) -> PreparedLMHead:
    """One-time weight prep (call at model load, NOT per forward):
    cast to compute_dtype, transpose to (d_model, vocab), pad to tile multiples.
    weight: (vocab_size, d_model) -- same layout as nn.Linear.weight."""
    vocab_size, d_model = weight.shape
    itemsize = jnp.dtype(compute_dtype).itemsize

    vmem_cap = _vmem_capacity_bytes()
    big_vmem = vmem_cap >= 100 * 2**20          # v5e / v6e (128 MiB) vs v7x (64 MiB)
    tm_max = 1024 if big_vmem else 512
    tn_max = 2048

    k_pad = _round_up(d_model, 128)
    if tk is None:
        tk = k_pad if k_pad <= _TK_SINGLE_MAX else _divisor_tile(k_pad, 2048)
    else:
        tk = _round_up(int(tk), 128)
        k_pad = _round_up(k_pad, tk)

    if tn is None:
        tn = min(tn_max, _round_up(vocab_size, 128))
    else:
        tn = _round_up(int(tn), 128)

    def footprint(_tm, _tn, _tk):
        a_b = _tm * _tk * itemsize
        w_b = _tk * _tn * itemsize
        o_b = _tm * _tn * 4                      # worst case f32 output
        b_b = _tn * 4
        acc = _tm * _tn * 4 if (k_pad // _tk) > 1 else 0
        return 2 * (a_b + w_b + o_b + b_b) + acc  # double-buffered tiles

    budget = int(0.55 * vmem_cap)
    while footprint(tm_max, tn, tk) > budget:
        if tm_max > 256:
            tm_max //= 2
        elif tn > 256:
            tn = max(256, _round_up(tn // 2, 128))
        else:
            break
    n_pad = _round_up(vocab_size, tn)

    w_t = jnp.asarray(weight).T.astype(compute_dtype)           # (d_model, vocab)
    w_t = jnp.pad(w_t, ((0, k_pad - d_model), (0, n_pad - vocab_size)))

    bias2d = None
    if bias is not None:
        bias2d = jnp.asarray(bias, jnp.float32).reshape(1, vocab_size)
        bias2d = jnp.pad(bias2d, ((0, 0), (0, n_pad - vocab_size)))

    vmem_limit = int(0.8 * vmem_cap)
    return PreparedLMHead(w_t, bias2d, int(vocab_size), int(d_model),
                          int(tn), int(tk), int(tm_max), int(vmem_limit))


# ---------------------------------------------------------------------------
# pallas_call builder
# ---------------------------------------------------------------------------

def _lm_head_pallas(a, w_t, bias2d, *, tm, tn, tk, out_dtype, vmem_limit):
    """a: (M_pad, K_pad) activations, w_t: (K_pad, N_pad) weight, bias2d: (1, N_pad)|None."""
    m_pad, k_pad = a.shape
    k_pad2, n_pad = w_t.shape
    assert k_pad == k_pad2
    assert m_pad % tm == 0 and n_pad % tn == 0 and k_pad % tk == 0
    n_k = k_pad // tk
    has_bias = bias2d is not None

    cost = pl.CostEstimate(
        flops=2 * m_pad * n_pad * k_pad,
        transcendentals=0,
        bytes_accessed=(m_pad * k_pad * a.dtype.itemsize
                        + k_pad * n_pad * w_t.dtype.itemsize
                        + m_pad * n_pad * jnp.dtype(out_dtype).itemsize),
    )
    # N leading: weight tile reused across the M axis; decode grid (M//tm == 1)
    # still shards across the two v7x TensorCores.
    grid_mn = (n_pad // tn, m_pad // tm)

    if n_k == 1:
        in_specs = [
            pl.BlockSpec((tm, k_pad), lambda j, i: (i, 0)),
            pl.BlockSpec((k_pad, tn), lambda j, i: (0, j)),
        ]
        inputs = [a, w_t]
        if has_bias:
            in_specs.append(pl.BlockSpec((1, tn), lambda j, i: (0, j)))
            inputs.append(bias2d)
        return pl.pallas_call(
            _make_single_k_kernel(has_bias),
            out_shape=jax.ShapeDtypeStruct((m_pad, n_pad), out_dtype),
            grid_spec=pltpu.PrefetchScalarGridSpec(
                num_scalar_prefetch=0,
                grid=grid_mn,
                in_specs=in_specs,
                out_specs=pl.BlockSpec((tm, tn), lambda j, i: (i, j)),
            ),
            compiler_params=pltpu.CompilerParams(
                dimension_semantics=("parallel", "parallel"),
                vmem_limit_bytes=vmem_limit,
            ),
            cost_estimate=cost,
        )(*inputs)

    # Multi-K path: K innermost ("arbitrary"), f32 accumulator scratch.
    in_specs = [
        pl.BlockSpec((tm, tk), lambda j, i, k: (i, k)),
        pl.BlockSpec((tk, tn), lambda j, i, k: (k, j)),
    ]
    inputs = [a, w_t]
    if has_bias:
        in_specs.append(pl.BlockSpec((1, tn), lambda j, i, k: (0, j)))
        inputs.append(bias2d)
    return pl.pallas_call(
        _make_multi_k_kernel(has_bias),
        out_shape=jax.ShapeDtypeStruct((m_pad, n_pad), out_dtype),
        grid_spec=pltpu.PrefetchScalarGridSpec(
            num_scalar_prefetch=0,
            grid=grid_mn + (n_k,),
            in_specs=in_specs,
            out_specs=pl.BlockSpec((tm, tn), lambda j, i, k: (i, j)),
            scratch_shapes=[pltpu.VMEM((tm, tn), jnp.float32)],
        ),
        compiler_params=pltpu.CompilerParams(
            dimension_semantics=("parallel", "parallel", "arbitrary"),
            vmem_limit_bytes=vmem_limit,
        ),
        cost_estimate=cost,
    )(*inputs)


# ---------------------------------------------------------------------------
# Forward (matches MambaLMHead.forward semantics)
# ---------------------------------------------------------------------------

@functools.partial(jax.jit,
                   static_argnames=("vocab_size", "tm", "tn", "tk", "vmem_limit"))
def _lm_head_apply(hidden_states, w_t, bias2d, *, vocab_size, tm, tn, tk, vmem_limit):
    batch, seq_len, d_model = hidden_states.shape
    out_dtype = hidden_states.dtype
    k_pad, _ = w_t.shape
    m = batch * seq_len

    a = hidden_states.reshape(m, d_model).astype(w_t.dtype)
    m_pad = _round_up(m, tm)
    if m_pad != m or k_pad != d_model:
        a = jnp.pad(a, ((0, m_pad - m), (0, k_pad - d_model)))

    logits = _lm_head_pallas(a, w_t, bias2d, tm=tm, tn=tn, tk=tk,
                             out_dtype=out_dtype, vmem_limit=vmem_limit)
    return logits[:m, :vocab_size].reshape(batch, seq_len, vocab_size)


def mamba_lm_head_forward(hidden_states, prepared: PreparedLMHead, *, tm=None):
    """hidden_states: (batch, seq_len, d_model) -> logits (batch, seq_len, vocab_size)."""
    batch, seq_len, d_model = hidden_states.shape
    assert d_model == prepared.d_model
    m = batch * seq_len
    sub = max(8, 32 // jnp.dtype(prepared.weight_t.dtype).itemsize)  # bf16 -> 16
    if tm is None:
        tm = min(prepared.tm_max, _round_up(m, sub))
    return _lm_head_apply(hidden_states, prepared.weight_t, prepared.bias2d,
                          vocab_size=prepared.vocab_size, tm=int(tm),
                          tn=prepared.tn, tk=prepared.tk,
                          vmem_limit=prepared.vmem_limit)


if __name__ == "__main__":
    key = jax.random.PRNGKey(0)
    k_x, k_w, k_x2, k_w2, k_b2 = jax.random.split(key, 5)

    # --- Test 1: small module-sized shapes, no bias (single-K fast path) ---
    batch, seq_len, d_model, vocab_size = 2, 8, 32, 256
    hidden = jax.random.normal(k_x, (batch, seq_len, d_model), dtype=jnp.float32)
    weight = 0.02 * jax.random.normal(k_w, (vocab_size, d_model), dtype=jnp.float32)

    prepared = prepare_lm_head(weight)           # one-time: bf16 cast + transpose + pad
    logits = jax.block_until_ready(mamba_lm_head_forward(hidden, prepared))

    ref = jnp.matmul(hidden.astype(jnp.bfloat16),
                     weight.T.astype(jnp.bfloat16),
                     preferred_element_type=jnp.float32).astype(jnp.float32)
    assert logits.shape == (batch, seq_len, vocab_size)
    assert logits.dtype == hidden.dtype
    assert jnp.allclose(logits, ref, atol=5e-3, rtol=5e-3)

    # --- Test 2: fused bias + non-128-multiple vocab + forced tiled-K path ---
    b2, s2, d2, v2 = 2, 8, 256, 300              # vocab 300 -> padded to 384 internally
    hidden2 = jax.random.normal(k_x2, (b2, s2, d2), dtype=jnp.float32)
    weight2 = 0.02 * jax.random.normal(k_w2, (v2, d2), dtype=jnp.float32)
    bias2 = 0.01 * jax.random.normal(k_b2, (v2,), dtype=jnp.float32)

    prepared2 = prepare_lm_head(weight2, bias2, tk=128)   # forces multi-K accumulator path
    logits2 = jax.block_until_ready(mamba_lm_head_forward(hidden2, prepared2))

    ref2 = jnp.matmul(hidden2.astype(jnp.bfloat16),
                      weight2.T.astype(jnp.bfloat16),
                      preferred_element_type=jnp.float32).astype(jnp.float32) + bias2
    assert logits2.shape == (b2, s2, v2)
    assert jnp.allclose(logits2, ref2, atol=5e-3, rtol=5e-3)

    print("KERNEL_OK")
</pallas_src>

<mosaic_0001>
module attributes {stable_mosaic.version = 11 : i64} {
  func.func @kernel(%arg0: i32, %arg1: i32, %arg2: memref<16x128xbf16, #tpu.memory_space<vmem>>, %arg3: memref<128x256xbf16, #tpu.memory_space<vmem>>, %arg4: memref<16x256xf32, #tpu.memory_space<vmem>>) attributes {dimension_semantics = [#tpu.dimension_semantics<parallel>, #tpu.dimension_semantics<parallel>], iteration_bounds = array<i64: 1, 1>, scalar_prefetch = 0 : i64, scratch_operands = 0 : i64, tpu.core_type = #tpu.core_type<tc>, window_params = [{transform_indices = @transform_0, window_bounds = array<i64: 16, 128>}, {transform_indices = @transform_1, window_bounds = array<i64: 128, 256>}, {transform_indices = @transform_2, window_bounds = array<i64: 16, 256>}]} {
    %c0 = arith.constant 0 : index
    %c0_0 = arith.constant 0 : index
    %0 = vector.load %arg2[%c0, %c0_0] : memref<16x128xbf16, #tpu.memory_space<vmem>>, vector<16x128xbf16>
    %c0_1 = arith.constant 0 : index
    %c0_2 = arith.constant 0 : index
    %1 = vector.load %arg3[%c0_1, %c0_2] : memref<128x256xbf16, #tpu.memory_space<vmem>>, vector<128x256xbf16>
    %cst = arith.constant dense<0.000000e+00> : vector<16x256xf32>
    %2 = tpu.matmul %0, %1, %cst {dimension_numbers = #tpu.dot_dimension_numbers<[1], [0], [0], [1], [0, 0, 1, 1], [], []>} : vector<16x128xbf16>, vector<128x256xbf16>, vector<16x256xf32> -> vector<16x256xf32>
    %c0_3 = arith.constant 0 : index
    %c0_4 = arith.constant 0 : index
    %3 = vector.load %arg4[%c0_3, %c0_4] : memref<16x256xf32, #tpu.memory_space<vmem>>, vector<16x256xf32>
    tpu.vector_store %arg4[%c0_3, %c0_4], %2 {strides = array<i32>} : memref<16x256xf32, #tpu.memory_space<vmem>>, vector<16x256xf32>,
    return
  }
  func.func @transform_0(%arg0: i32, %arg1: i32) -> (i32, i32) {
    %c0_i32 = arith.constant 0 : i32
    %c0_i32_0 = arith.constant 0 : i32
    return %arg1, %c0_i32 : i32, i32
  }
  func.func @transform_1(%arg0: i32, %arg1: i32) -> (i32, i32) {
    %c0_i32 = arith.constant 0 : i32
    %c0_i32_0 = arith.constant 0 : i32
    return %c0_i32, %arg0 : i32, i32
  }
  func.func @transform_2(%arg0: i32, %arg1: i32) -> (i32, i32) {
    %c0_i32 = arith.constant 0 : i32
    return %arg1, %arg0 : i32, i32
  }
}

</mosaic_0001>

<llo_original>
// kernel: _lm_head_apply.1
$region0: #{_lm_head_apply.1}
  #allocation0 [shape = 'u32[]', space=smem, size = 0x4, offset = 0x4, fixed_abs, tag = 'smem constant byte address 0x4 - core index']
  #allocation1 [shape = 'u32[72,128]{1,0:T(1,128)}', space=vmem, size = 0x9000, scoped, tag = 'internal scratch']
  %s0 = inlined_call_operand.vmem [shape: bf16[16,128], index: 0, kind: input, shape index: {}]
  %s1 = inlined_call_operand.hbm [shape: bf16[128,256], index: 1, kind: input, shape index: {}]
  %s2 = inlined_call_operand.hbm [shape: f32[16,256], index: 2, kind: output, shape index: {}]
  %s3 = sld [smem:[#allocation0]]
  $region22: #{_lm_head_apply.1} parent=0
    _
  %s5 = ssub.s32 1, %s3
  %s6 = scalar_select 0, %s5, %s3
  $region1: #{_lm_head_apply.1} parent=0
    #allocation2 [shape = 'u8[65536]{0}', space=vmem, size = 0x10000, scoped, tag = 'input window, operand 1, single buffered']
    #allocation3 [shape = 's32[1]{0}', space=sflag, size = 0x4, scoped, tag = 'scoped memory for _lm_head_apply.1']
    #allocation4 [shape = 's32[1]{0}', space=sflag, size = 0x4, scoped, tag = 'scoped memory for _lm_head_apply.1']
    #allocation5 [shape = 'u8[16384]{0}', space=vmem, size = 0x4000, scoped, tag = 'output window, operand 0, single buffered']
    %7 = vsyncpa [#allocation3], 0
    %8 = vsyncpa [#allocation4], 0
    // Predicated region
    $region2: #{_lm_head_apply.1} parent=1 // pred_check
      _
    $region3: #{_lm_head_apply.1} parent=1 // pred_check_branch
      %10 = sbr.rel (0) target = $region5
    $region4: #{_lm_head_apply.1} parent=1 // pred_region
      _
    $region5: #{_lm_head_apply.1} parent=1 // pred_fallthru
      _
    // Predicated region
    $region6: #{_lm_head_apply.1} parent=1 // pred_check
      _
    $region7: #{_lm_head_apply.1} parent=1 // pred_check_branch
      %12 = sbr.rel (0) target = $region9
    $region8: #{_lm_head_apply.1} parent=1 // pred_region
      %14 = vsyncadd [#allocation3], 0
      %s15 = sshll.u32 %s1, 4
      %s16 = int_to_ptr.hbm [resolvable:$true] %s15
      %s17 = sshll.u32 [#allocation2], 4
      %s18 = int_to_ptr.vmem [resolvable:$true] %s17
      %23 = dma.hbm_to_vmem [thread:$0]  %s16, 2048, %s18, [#allocation3], 128, 128, 8
    $region9: #{_lm_head_apply.1} parent=1 // pred_fallthru
      _
    // Predicated region
    $region10: #{_lm_head_apply.1} parent=1 // pred_check
      _
    $region11: #{_lm_head_apply.1} parent=1 // pred_check_branch
      %25 = sbr.rel (0) target = $region13
    $region12: #{_lm_head_apply.1} parent=1 // pred_region
      %27 = dma.done [#allocation3], 2048
    $region13: #{_lm_head_apply.1} parent=1 // pred_fallthru
      _
    %v28 = vld [vmem:[%s0] sm:$0xf]
    %v29 = vld [vmem:[%s0 + $0x4] sm:$0xf]
    %v30 = vld [vmem:[#allocation2] sm:$0xff]
    %v31 = vld [vmem:[#allocation2 + $0x8] sm:$0xff]
    %v32 = vld [vmem:[#allocation2 + $0x10] sm:$0xff]
    %v33 = vld [vmem:[#allocation2 + $0x18] sm:$0xff]
    %v34 = vld [vmem:[#allocation2 + $0x20] sm:$0xff]
    %v35 = vld [vmem:[#allocation2 + $0x28] sm:$0xff]
    %v36 = vld [vmem:[#allocation2 + $0x30] sm:$0xff]
    %v37 = vld [vmem:[#allocation2 + $0x38] sm:$0xff]
    %v38 = vld [vmem:[#allocation2 + $0x40] sm:$0xff]
    %v39 = vld [vmem:[#allocation2 + $0x48] sm:$0xff]
    %v40 = vld [vmem:[#allocation2 + $0x50] sm:$0xff]
    %v41 = vld [vmem:[#allocation2 + $0x58] sm:$0xff]
    %v42 = vld [vmem:[#allocation2 + $0x60] sm:$0xff]
    %v43 = vld [vmem:[#allocation2 + $0x68] sm:$0xff]
    %v44 = vld [vmem:[#allocation2 + $0x70] sm:$0xff]
    %v45 = vld [vmem:[#allocation2 + $0x78] sm:$0xff]
    %v48 = vunpack.c.l.b16 %v28
    %v49 = vunpack.c.l.b16 %v29
    %v50 = vpack.c.b16 %v49, %v48
    %v68 = vunpack.c.l.b16 %v30
    %v69 = vunpack.c.h.b16 %v30
    %v70 = vunpack.c.l.b16 %v31
    %v71 = vunpack.c.h.b16 %v31
    %v72 = vunpack.c.l.b16 %v32
    %v73 = vunpack.c.h.b16 %v32
    %v74 = vunpack.c.l.b16 %v33
    %v75 = vunpack.c.h.b16 %v33
    %v76 = vunpack.c.l.b16 %v34
    %v77 = vunpack.c.h.b16 %v34
    %v78 = vunpack.c.l.b16 %v35
    %v79 = vunpack.c.h.b16 %v35
    %v80 = vunpack.c.l.b16 %v36
    %v81 = vunpack.c.h.b16 %v36
    %v82 = vunpack.c.l.b16 %v37
    %v83 = vunpack.c.h.b16 %v37
    %v84 = vunpack.c.l.b16 %v38
    %v85 = vunpack.c.h.b16 %v38
    %v86 = vunpack.c.l.b16 %v39
    %v87 = vunpack.c.h.b16 %v39
    %v88 = vunpack.c.l.b16 %v40
    %v89 = vunpack.c.h.b16 %v40
    %v90 = vunpack.c.l.b16 %v41
    %v91 = vunpack.c.h.b16 %v41
    %v92 = vunpack.c.l.b16 %v42
    %v93 = vunpack.c.h.b16 %v42
    %v94 = vunpack.c.l.b16 %v43
    %v95 = vunpack.c.h.b16 %v43
    %v96 = vunpack.c.l.b16 %v44
    %v97 = vunpack.c.h.b16 %v44
    %v98 = vunpack.c.l.b16 %v45
    %v99 = vunpack.c.h.b16 %v45
    %v100 = vpack.c.b16 %v70, %v68
    %v101 = vpack.c.b16 %v71, %v69
    %v102 = vpack.c.b16 %v74, %v72
    %v103 = vpack.c.b16 %v75, %v73
    %v104 = vpack.c.b16 %v78, %v76
    %v105 = vpack.c.b16 %v79, %v77
    %v106 = vpack.c.b16 %v82, %v80
    %v107 = vpack.c.b16 %v83, %v81
    %v108 = vpack.c.b16 %v86, %v84
    %v109 = vpack.c.b16 %v87, %v85
    %v110 = vpack.c.b16 %v90, %v88
    %v111 = vpack.c.b16 %v91, %v89
    %v112 = vpack.c.b16 %v94, %v92
    %v113 = vpack.c.b16 %v95, %v93
    %v114 = vpack.c.b16 %v98, %v96
    %v115 = vpack.c.b16 %v99, %v97
    %132 = vmatpush.bf16.msra.mxu0 %v114
    %133 = vmatpush.bf16.msra.mxu0 %v112
    %134 = vmatpush.bf16.msra.mxu0 %v110
    %135 = vmatpush.bf16.msra.mxu0 %v108
    %136 = vmatpush.bf16.msra.mxu0 %v106
    %137 = vmatpush.bf16.msra.mxu0 %v104
    %138 = vmatpush.bf16.msra.mxu0 %v102
    %139 = vmatpush.bf16.msra.mxu0 %v100
    %140 = vmatmul.bf16.gmra.mxu0 %v50
    %v141 = vpop.f32.mrf.mxu0
    %v142 = vadd.f32 0.0, %v141
    %v143 = vpop.f32.mrf.mxu0
    %v144 = vadd.f32 0.0, %v143
    %145 = vdwg.mxu0
    %146 = vmatpush.bf16.msra.mxu0 %v115
    %147 = vmatpush.bf16.msra.mxu0 %v113
    %148 = vmatpush.bf16.msra.mxu0 %v111
    %149 = vmatpush.bf16.msra.mxu0 %v109
    %150 = vmatpush.bf16.msra.mxu0 %v107
    %151 = vmatpush.bf16.msra.mxu0 %v105
    %152 = vmatpush.bf16.msra.mxu0 %v103
    %153 = vmatpush.bf16.msra.mxu0 %v101
    %154 = vmatmul.bf16.gmra.mxu0 %v50
    %v155 = vpop.f32.mrf.mxu0
    %v156 = vadd.f32 0.0, %v155
    %v157 = vpop.f32.mrf.mxu0
    %v158 = vadd.f32 0.0, %v157
    %159 = vdwg.mxu0
    %160 = vst [vmem:[#allocation5] sm:$0xff] %v142
    %161 = vst [vmem:[#allocation5 + $0x8] sm:$0xff] %v156
    %162 = vst [vmem:[#allocation5 + $0x10] sm:$0xff] %v144
    %163 = vst [vmem:[#allocation5 + $0x18] sm:$0xff] %v158
    // Predicated region
    $region14: #{_lm_head_apply.1} parent=1 // pred_check
      _
    $region15: #{_lm_head_apply.1} parent=1 // pred_check_branch
      %165 = sbr.rel (0) target = $region17
    $region16: #{_lm_head_apply.1} parent=1 // pred_region
      %167 = vsyncadd [#allocation4], 0
      %s168 = sshll.u32 [#allocation5], 4
      %s169 = int_to_ptr.vmem [resolvable:$true] %s168
      %s170 = sshll.u32 %s2, 4
      %s171 = int_to_ptr.hbm [resolvable:$true] %s170
      %176 = dma.vmem_to_hbm [thread:$0]  %s169, 512, %s171, [#allocation4], 256, 256, 16
    $region17: #{_lm_head_apply.1} parent=1 // pred_fallthru
      _
    // Predicated region
    $region18: #{_lm_head_apply.1} parent=1 // pred_check
      _
    $region19: #{_lm_head_apply.1} parent=1 // pred_check_branch
      %178 = sbr.rel (0) target = $region21
    $region20: #{_lm_head_apply.1} parent=1 // pred_region
      %180 = dma.done [#allocation4], 512
    $region21: #{_lm_head_apply.1} parent=1 // pred_fallthru
      _
    %181 = vsyncpa [#allocation3], 1
    %182 = vsyncpa [#allocation4], 1

</llo_original>
